<compile_context>
chip_gen: v7x
topology: tpu7x:2x2x1
jax: 0.10.0
libtpu: 0.0.40
codegen_flags: <defaults>
</compile_context>

<pallas_src>
import jax
import jax.numpy as jnp
from jax.experimental import pallas as pl
from jax.experimental.pallas import tpu as pltpu

# ----------------------- model hyper-parameters ----------------------------
VOCAB_SIZE = 50
EMBED_DIM = 32          # params['embedding_dim']
FILTER_SIZE = 3         # params['filter_size']
N_FILTERS = 8           # params['n_filters']
N_LAYERS = 2            # params['n_layers']
BATCH = 2
SEQ_LEN = 16
L_OUT = SEQ_LEN - FILTER_SIZE + 1        # valid-conv output length
NF_TOT = N_LAYERS * N_FILTERS            # concatenated feature width
PAD_ROWS = FILTER_SIZE - 1               # extra (zero-embedding) rows for im2col
N_ROWS = BATCH * SEQ_LEN + PAD_ROWS      # padded flat token rows


# ----------------------------- Pallas kernel --------------------------------
def cnn_kernel(ids_ref, emb_ref, wmat_ref, bvec_ref, fcw_ref, fcb_ref, out_ref):
    """Whole forward pass on whole-array refs (single grid point).

    ids_ref  : (N_ROWS, 1)  int32   flat token ids, padded with -1
    emb_ref  : (V+1, E)     f32     embedding table
    wmat_ref : (F_SZ*E, NF_TOT) f32 im2col conv weights (taps stacked on rows,
                                    layers*filters on columns)
    bvec_ref : (1, NF_TOT)  f32     conv biases, (layer, filter) order
    fcw_ref  : (NF_TOT, 1)  f32     pre-transposed fc weight
    fcb_ref  : (1, 1)       f32     fc bias (SMEM scalar)
    out_ref  : (B, 1)       f32     sigmoid output
    """
    # ---- embedding lookup as a one-hot MXU matmul (fused, no XLA gather) ----
    ids = ids_ref[...]                                              # (N_ROWS, 1)
    vocab_iota = jax.lax.broadcasted_iota(
        jnp.int32, (N_ROWS, VOCAB_SIZE + 1), 1)
    onehot = (ids == vocab_iota).astype(jnp.float32)                # (N_ROWS, V+1)
    emb = jnp.dot(onehot, emb_ref[...],
                  preferred_element_type=jnp.float32)               # (N_ROWS, E)

    # ---- im2col: one matmul for all taps and all conv layers ----------------
    # window rows are flat (b, s) positions; padded rows are all-zero embeddings.
    win = jnp.concatenate(
        [emb[t:t + BATCH * SEQ_LEN, :] for t in range(FILTER_SIZE)],
        axis=1)                                                     # (B*S, F_SZ*E)
    scores = jnp.dot(win, wmat_ref[...],
                     preferred_element_type=jnp.float32)            # (B*S, NF_TOT)
    scores = jnp.maximum(scores + bvec_ref[...], 0.0)               # bias + ReLU

    # ---- max-pool over valid conv positions per batch element ---------------
    s3 = scores.reshape(BATCH, SEQ_LEN, NF_TOT)                     # (B, S, NF_TOT)
    pos = jax.lax.broadcasted_iota(jnp.int32, s3.shape, 1)
    # positions >= L_OUT correspond to windows that run off the sequence
    # (cross into the next batch / the zero padding) -> mask to 0 (ReLU >= 0,
    # so this cannot change the per-batch max).
    s3 = jnp.where(pos < L_OUT, s3, 0.0)
    pooled = jnp.max(s3, axis=1)                                    # (B, NF_TOT)

    # ---- fc + sigmoid --------------------------------------------------------
    logit = jnp.dot(pooled, fcw_ref[...],
                    preferred_element_type=jnp.float32) + fcb_ref[0, 0]
    out_ref[...] = jax.nn.sigmoid(logit)                            # (B, 1)


@jax.jit
def cnn_forward(token_ids, emb_table, conv_w, conv_b, fc_w, fc_b):
    # Layout plumbing in the wrapper (free on parameters):
    ids_flat = token_ids.reshape(BATCH * SEQ_LEN).astype(jnp.int32)
    ids_pad = jnp.concatenate(
        [ids_flat, jnp.full((PAD_ROWS,), -1, jnp.int32)]).reshape(N_ROWS, 1)
    # conv_w: (n_layers, filter_size, E, F) -> im2col matrix (filter_size*E, n_layers*F)
    w_mat = conv_w.transpose(1, 2, 0, 3).reshape(FILTER_SIZE * EMBED_DIM, NF_TOT)
    b_vec = conv_b.reshape(1, NF_TOT)
    fc_w_t = fc_w.T                              # (NF_TOT, 1) pre-transposed
    fc_b_s = fc_b.reshape(1, 1).astype(jnp.float32)

    vmem = pl.BlockSpec(memory_space=pltpu.MemorySpace.VMEM)
    smem = pl.BlockSpec(memory_space=pltpu.MemorySpace.SMEM)
    return pl.pallas_call(
        cnn_kernel,
        out_shape=jax.ShapeDtypeStruct((BATCH, 1), jnp.float32),
        in_specs=[vmem, vmem, vmem, vmem, vmem, smem],
        out_specs=vmem,
    )(ids_pad, emb_table.astype(jnp.float32), w_mat, b_vec, fc_w_t, fc_b_s)


# ----------------------------- JAX reference ---------------------------------
def cnn_reference(token_ids, emb_table, conv_w, conv_b, fc_w, fc_b):
    emb = jnp.take(emb_table, token_ids, axis=0).astype(jnp.float32)   # (B,S,E)
    feats = []
    for layer in range(N_LAYERS):
        scores = jnp.zeros((BATCH, L_OUT, N_FILTERS), jnp.float32)
        for t in range(FILTER_SIZE):
            scores = scores + jnp.einsum(
                'ble,ef->blf', emb[:, t:t + L_OUT, :], conv_w[layer, t])
        scores = jnp.maximum(scores + conv_b[layer][None, None, :], 0.0)
        feats.append(jnp.max(scores, axis=1))
    feat = jnp.concatenate(feats, axis=1)                              # (B, NF_TOT)
    return jax.nn.sigmoid(feat @ fc_w.T + fc_b)                        # (B, 1)


# --------------------------------- main --------------------------------------
if __name__ == "__main__":
    key = jax.random.PRNGKey(0)
    k_tok, k_emb, k_cw, k_cb, k_fw, k_fb = jax.random.split(key, 6)

    token_ids = jax.random.randint(k_tok, (BATCH, SEQ_LEN), 0, VOCAB_SIZE + 1,
                                   dtype=jnp.int32)
    emb_table = jax.random.normal(k_emb, (VOCAB_SIZE + 1, EMBED_DIM),
                                  jnp.float32) * 0.1
    # nn.Conv2d weight is (F, 1, filter_size, E); stored here as
    # (n_layers, filter_size, E, F) to make the matmul layout explicit.
    conv_w = jax.random.normal(
        k_cw, (N_LAYERS, FILTER_SIZE, EMBED_DIM, N_FILTERS), jnp.float32) * 0.1
    conv_b = jax.random.normal(k_cb, (N_LAYERS, N_FILTERS), jnp.float32) * 0.1
    fc_w = jax.random.normal(k_fw, (1, NF_TOT), jnp.float32) * 0.1
    fc_b = jax.random.normal(k_fb, (1, 1), jnp.float32) * 0.1

    out = jax.block_until_ready(
        cnn_forward(token_ids, emb_table, conv_w, conv_b, fc_w, fc_b))

    ref = cnn_reference(token_ids, emb_table, conv_w, conv_b, fc_w, fc_b)
    assert out.shape == (BATCH, 1), out.shape
    assert ref.shape == (BATCH, 1), ref.shape
    assert jnp.allclose(out, ref, atol=1e-5, rtol=1e-5), (out, ref)

    print("KERNEL_OK")
</pallas_src>

<mosaic_0001>
module attributes {stable_mosaic.version = 11 : i64} {
  func.func @cnn_kernel(%arg0: memref<34x1xi32, #tpu.memory_space<vmem>>, %arg1: memref<51x32xf32, #tpu.memory_space<vmem>>, %arg2: memref<96x16xf32, #tpu.memory_space<vmem>>, %arg3: memref<1x16xf32, #tpu.memory_space<vmem>>, %arg4: memref<16x1xf32, #tpu.memory_space<vmem>>, %arg5: memref<1x1xf32, #tpu.memory_space<smem>>, %arg6: memref<2x1xf32, #tpu.memory_space<vmem>>) attributes {dimension_semantics = [], scalar_prefetch = 0 : i64, scratch_operands = 0 : i64, tpu.core_type = #tpu.core_type<tc>} {
    %c0 = arith.constant 0 : index
    %c0_0 = arith.constant 0 : index
    %0 = vector.load %arg0[%c0, %c0_0] : memref<34x1xi32, #tpu.memory_space<vmem>>, vector<34x1xi32>
    %1 = tpu.iota {dimensions = array<i32: 1>} : vector<34x51xi32>
    %2 = vector.broadcast %0 : vector<34x1xi32> to vector<34x51xi32>
    %3 = arith.cmpi eq, %2, %1 : vector<34x51xi32>
    %4 = arith.extui %3 : vector<34x51xi1> to vector<34x51xi32>
    %5 = arith.sitofp %4 : vector<34x51xi32> to vector<34x51xf32>
    %c0_1 = arith.constant 0 : index
    %c0_2 = arith.constant 0 : index
    %6 = vector.load %arg1[%c0_1, %c0_2] : memref<51x32xf32, #tpu.memory_space<vmem>>, vector<51x32xf32>
    %cst = arith.constant dense<0.000000e+00> : vector<34x32xf32>
    %7 = tpu.matmul %5, %6, %cst {dimension_numbers = #tpu.dot_dimension_numbers<[1], [0], [0], [1], [0, 0, 1, 1], [], []>} : vector<34x51xf32>, vector<51x32xf32>, vector<34x32xf32> -> vector<34x32xf32>
    %8 = vector.extract_strided_slice %7 {offsets = [0, 0], sizes = [32, 32], strides = [1, 1]} : vector<34x32xf32> to vector<32x32xf32>
    %9 = vector.extract_strided_slice %7 {offsets = [1, 0], sizes = [32, 32], strides = [1, 1]} : vector<34x32xf32> to vector<32x32xf32>
    %10 = vector.extract_strided_slice %7 {offsets = [2, 0], sizes = [32, 32], strides = [1, 1]} : vector<34x32xf32> to vector<32x32xf32>
    %11 = tpu.concatenate %8, %9, %10 in 1 : vector<32x32xf32>, vector<32x32xf32>, vector<32x32xf32> -> vector<32x96xf32>
    %c0_3 = arith.constant 0 : index
    %c0_4 = arith.constant 0 : index
    %12 = vector.load %arg2[%c0_3, %c0_4] : memref<96x16xf32, #tpu.memory_space<vmem>>, vector<96x16xf32>
    %cst_5 = arith.constant dense<0.000000e+00> : vector<32x16xf32>
    %13 = tpu.matmul %11, %12, %cst_5 {dimension_numbers = #tpu.dot_dimension_numbers<[1], [0], [0], [1], [0, 0, 1, 1], [], []>} : vector<32x96xf32>, vector<96x16xf32>, vector<32x16xf32> -> vector<32x16xf32>
    %c0_6 = arith.constant 0 : index
    %c0_7 = arith.constant 0 : index
    %14 = vector.load %arg3[%c0_6, %c0_7] : memref<1x16xf32, #tpu.memory_space<vmem>>, vector<1x16xf32>
    %15 = vector.broadcast %14 : vector<1x16xf32> to vector<32x16xf32>
    %16 = arith.addf %13, %15 : vector<32x16xf32>
    %cst_8 = arith.constant 0.000000e+00 : f32
    %17 = vector.broadcast %cst_8 : f32 to vector<32x16xf32>
    %18 = arith.maximumf %16, %17 : vector<32x16xf32>
    %19 = vector.shape_cast %18 : vector<32x16xf32> to vector<2x16x16xf32>
    %20 = tpu.iota {dimensions = array<i32: 1>} : vector<2x16x16xi32>
    %c14_i32 = arith.constant 14 : i32
    %21 = vector.broadcast %c14_i32 : i32 to vector<2x16x16xi32>
    %22 = arith.cmpi slt, %20, %21 : vector<2x16x16xi32>
    %cst_9 = arith.constant 0.000000e+00 : f32
    %23 = vector.broadcast %cst_9 : f32 to vector<2x16x16xf32>
    %24 = arith.select %22, %19, %23 : vector<2x16x16xi1>, vector<2x16x16xf32>
    %cst_10 = arith.constant dense<0xFF800000> : vector<2x16xf32>
    %25 = vector.multi_reduction <maximumf>, %24, %cst_10 [1] : vector<2x16x16xf32> to vector<2x16xf32>
    %c0_11 = arith.constant 0 : index
    %c0_12 = arith.constant 0 : index
    %26 = vector.load %arg4[%c0_11, %c0_12] : memref<16x1xf32, #tpu.memory_space<vmem>>, vector<16x1xf32>
    %cst_13 = arith.constant dense<0.000000e+00> : vector<2x1xf32>
    %27 = tpu.matmul %25, %26, %cst_13 {dimension_numbers = #tpu.dot_dimension_numbers<[1], [0], [0], [1], [0, 0, 1, 1], [], []>} : vector<2x16xf32>, vector<16x1xf32>, vector<2x1xf32> -> vector<2x1xf32>
    %c0_14 = arith.constant 0 : index
    %c0_15 = arith.constant 0 : index
    %28 = memref.load %arg5[%c0_14, %c0_15] : memref<1x1xf32, #tpu.memory_space<smem>>
    %29 = vector.broadcast %28 : f32 to vector<2x1xf32>
    %30 = arith.addf %27, %29 : vector<2x1xf32>
    %31 = arith.negf %30 : vector<2x1xf32>
    %32 = math.exp %31 : vector<2x1xf32>
    %cst_16 = arith.constant 1.000000e+00 : f32
    %33 = vector.broadcast %cst_16 : f32 to vector<2x1xf32>
    %34 = arith.addf %33, %32 : vector<2x1xf32>
    %35 = arith.divf %33, %34 : vector<2x1xf32>
    %c0_17 = arith.constant 0 : index
    %c0_18 = arith.constant 0 : index
    %36 = vector.load %arg6[%c0_17, %c0_18] : memref<2x1xf32, #tpu.memory_space<vmem>>, vector<2x1xf32>
    tpu.vector_store %arg6[%c0_17, %c0_18], %35 {strides = array<i32>} : memref<2x1xf32, #tpu.memory_space<vmem>>, vector<2x1xf32>,
    return
  }
}

</mosaic_0001>

<llo_original>
// kernel: cnn_forward.1
$region0: #{cnn_forward.1}
  #allocation0 [shape = 'u32[]', space=smem, size = 0x4, offset = 0x4, fixed_abs, tag = 'smem constant byte address 0x4 - core index']
  #allocation1 [shape = 'u32[144,128]{1,0:T(1,128)}', space=vmem, size = 0x12000, scoped, tag = 'internal scratch']
  #allocation2 [shape = 'f32[1,1]{1,0:T(1,128)S(6)}', space=smem, size = 0x200, scoped, tag = 'scoped memory for cnn_forward.1']
  %s0 = inlined_call_operand.vmem [shape: s32[34,1], index: 0, kind: input, shape index: {}]
  %s1 = inlined_call_operand.vmem [shape: f32[51,32], index: 1, kind: input, shape index: {}]
  %s2 = inlined_call_operand.vmem [shape: f32[96,16], index: 2, kind: input, shape index: {}]
  %s3 = inlined_call_operand.vmem [shape: f32[1,16], index: 3, kind: input, shape index: {}]
  %s4 = inlined_call_operand.vmem [shape: f32[16,1], index: 4, kind: input, shape index: {}]
  %s5 = inlined_call_operand.<no memory space> [shape: f32[1,1], index: 5, kind: input, shape index: {}]
  %s6 = inlined_call_operand.vmem [shape: f32[2,1], index: 6, kind: output, shape index: {}]
  %s7 = sld [smem:[#allocation0]]
  $region34: #{cnn_forward.1} parent=0
    _
  %s9 = ssub.s32 1, %s7
  %s10 = scalar_select 0, %s9, %s7
  %11 = sst [smem:[#allocation2]] %s5
  // Predicated region
  $region2: #{cnn_forward.1} parent=0 // pred_check
    _
  $region3: #{cnn_forward.1} parent=0 // pred_check_branch
    %13 = sbr.rel (0) target = $region5
  $region4: #{cnn_forward.1} parent=0 // pred_region
    _
  $region5: #{cnn_forward.1} parent=0 // pred_fallthru
    _
  // Predicated region
  $region6: #{cnn_forward.1} parent=0 // pred_check
    _
  $region7: #{cnn_forward.1} parent=0 // pred_check_branch
    %15 = sbr.rel (0) target = $region9
  $region8: #{cnn_forward.1} parent=0 // pred_region
    _
  $region9: #{cnn_forward.1} parent=0 // pred_fallthru
    _
  // Predicated region
  $region10: #{cnn_forward.1} parent=0 // pred_check
    _
  $region11: #{cnn_forward.1} parent=0 // pred_check_branch
    %17 = sbr.rel (0) target = $region13
  $region12: #{cnn_forward.1} parent=0 // pred_region
    _
  $region13: #{cnn_forward.1} parent=0 // pred_fallthru
    _
  // Predicated region
  $region14: #{cnn_forward.1} parent=0 // pred_check
    _
  $region15: #{cnn_forward.1} parent=0 // pred_check_branch
    %19 = sbr.rel (0) target = $region17
  $region16: #{cnn_forward.1} parent=0 // pred_region
    _
  $region17: #{cnn_forward.1} parent=0 // pred_fallthru
    _
  // Predicated region
  $region18: #{cnn_forward.1} parent=0 // pred_check
    _
  $region19: #{cnn_forward.1} parent=0 // pred_check_branch
    %21 = sbr.rel (0) target = $region21
  $region20: #{cnn_forward.1} parent=0 // pred_region
    _
  $region21: #{cnn_forward.1} parent=0 // pred_fallthru
    _
  // Predicated region
  $region22: #{cnn_forward.1} parent=0 // pred_check
    _
  $region23: #{cnn_forward.1} parent=0 // pred_check_branch
    %23 = sbr.rel (0) target = $region25
  $region24: #{cnn_forward.1} parent=0 // pred_region
    _
  $region25: #{cnn_forward.1} parent=0 // pred_fallthru
    _
  %v24 = vld [vmem:[%s0] sm:$0xff]
  %v25 = vld [vmem:[%s0 + $0x8] sm:$0xff]
  %v26 = vld [vmem:[%s0 + $0x10] sm:$0xff]
  %v27 = vld [vmem:[%s0 + $0x18] sm:$0xff]
  %v28 = vld [vmem:[%s0 + $0x20] sm:$0x3]
  %v29 = vlaneseq
  %v30 = vand.u32 %v29, 127
  %31 = vset.pattern.permute.xlu0 0
  %32 = vperm.xlu0 %31, %v24
  %v33 = vpop.permute.xlu0 %32
  %34 = vset.pattern.permute.xlu0 0
  %35 = vperm.xlu0 %34, %v25
  %v36 = vpop.permute.xlu0 %35
  %37 = vset.pattern.permute.xlu0 0
  %38 = vperm.xlu0 %37, %v26
  %v39 = vpop.permute.xlu0 %38
  %40 = vset.pattern.permute.xlu0 0
  %41 = vperm.xlu0 %40, %v27
  %v42 = vpop.permute.xlu0 %41
  %43 = vset.pattern.permute.xlu0 0
  %44 = vperm.xlu0 %43, %v28
  %v45 = vpop.permute.xlu0 %44
  %vm46 = vcmp.eq.s32.totalorder %v33, %v30
  %vm47 = vcmp.eq.s32.totalorder %v36, %v30
  %vm48 = vcmp.eq.s32.totalorder %v39, %v30
  %vm49 = vcmp.eq.s32.totalorder %v42, %v30
  %vm50 = vcmp.eq.s32.totalorder %v45, %v30
  %v51 = vsel %vm46, 1, 0
  %v52 = vsel %vm47, 1, 0
  %v53 = vsel %vm48, 1, 0
  %v54 = vsel %vm49, 1, 0
  %v55 = vsel %vm50, 1, 0
  %v56 = vcvt.s32.f32 %v51
  %v57 = vcvt.s32.f32 %v52
  %v58 = vcvt.s32.f32 %v53
  %v59 = vcvt.s32.f32 %v54
  %v60 = vcvt.s32.f32 %v55
  %v61 = vld [vmem:[%s1] sm:$0xff]
  %v62 = vld [vmem:[%s1 + $0x8] sm:$0xff]
  %v63 = vld [vmem:[%s1 + $0x10] sm:$0xff]
  %v64 = vld [vmem:[%s1 + $0x18] sm:$0xff]
  %v65 = vld [vmem:[%s1 + $0x20] sm:$0xff]
  %v66 = vld [vmem:[%s1 + $0x28] sm:$0xff]
  %v67 = vld [vmem:[%s1 + $0x30] sm:$0x7]
  %vm68 = vcmask 416768
  %v70 = vsel %vm68, %v56, 0
  %v73 = vsel %vm68, %v57, 0
  %v76 = vsel %vm68, %v58, 0
  %v79 = vsel %vm68, %v59, 0
  %v82 = vsel %vm68, %v60, 0
  %vm84 = vcmask 1042432
  %v86 = vsel %vm84, %v67, 0
  %88 = vmatprep.subr.mxu0 0.0
  %89 = vmatpush1.msra.mxu0 %v61
  %90 = vmatprep.subr.mxu0 0.0
  %91 = vmatpush1.msra.mxu0 %v62
  %92 = vmatprep.subr.mxu0 0.0
  %93 = vmatpush1.msra.mxu0 %v63
  %94 = vmatprep.subr.mxu0 0.0
  %95 = vmatpush1.msra.mxu0 %v64
  %96 = vmatprep.subr.mxu0 0.0
  %97 = vmatpush1.msra.mxu0 %v65
  %98 = vmatprep.subr.mxu0 0.0
  %99 = vmatpush1.msra.mxu0 %v66
  %100 = vmatprep.subr.mxu0 0.0
  %101 = vmatpush1.msra.mxu0 %v86
  %102 = vmatprep.subr.mxu0 0.0
  %103 = vmatpush1.msra.mxu0 0.0
  %104 = vmatprep.subr.mxu0 0.0
  %105 = vmatpush1.msra.mxu0 0.0
  %106 = vmatprep.subr.mxu0 0.0
  %107 = vmatpush1.msra.mxu0 0.0
  %108 = vmatprep.subr.mxu0 0.0
  %109 = vmatpush1.msra.mxu0 0.0
  %110 = vmatprep.subr.mxu0 0.0
  %111 = vmatpush1.msra.mxu0 0.0
  %112 = vmatprep.subr.mxu0 0.0
  %113 = vmatpush1.msra.mxu0 0.0
  %114 = vmatprep.subr.mxu0 0.0
  %115 = vmatpush1.msra.mxu0 0.0
  %116 = vmatprep.subr.mxu0 0.0
  %117 = vmatpush1.msra.mxu0 0.0
  %118 = vmatprep.subr.mxu0 0.0
  %119 = vmatpush1.msra.mxu0 0.0
  %120 = vmatprep.subr.mxu0 0.0
  %121 = vmatpush1.msra.mxu0 0.0
  %122 = vmatprep.subr.mxu0 0.0
  %123 = vmatpush1.msra.mxu0 0.0
  %124 = vmatprep.subr.mxu0 0.0
  %125 = vmatpush1.msra.mxu0 0.0
  %126 = vmatprep.subr.mxu0 0.0
  %127 = vmatpush1.msra.mxu0 0.0
  %128 = vmatprep.subr.mxu0 0.0
  %129 = vmatpush1.msra.mxu0 0.0
  %130 = vmatprep.subr.mxu0 0.0
  %131 = vmatpush1.msra.mxu0 0.0
  %132 = vmatprep.subr.mxu0 0.0
  %133 = vmatpush1.msra.mxu0 0.0
  %134 = vmatprep.subr.mxu0 0.0
  %135 = vmatpush1.msra.mxu0 0.0
  %136 = vmatprep.subr.mxu0 0.0
  %137 = vmatpush1.msra.mxu0 0.0
  %138 = vmatprep.subr.mxu0 0.0
  %139 = vmatpush1.msra.mxu0 0.0
  %140 = vmatprep.subr.mxu0 0.0
  %141 = vmatpush1.msra.mxu0 0.0
  %142 = vmatprep.subr.mxu0 0.0
  %143 = vmatpush1.msra.mxu0 0.0
  %144 = vmatprep.subr.mxu0 0.0
  %145 = vmatpush1.msra.mxu0 0.0
  %146 = vmatprep.subr.mxu0 0.0
  %147 = vmatpush1.msra.mxu0 0.0
  %148 = vmatprep.subr.mxu0 0.0
  %149 = vmatpush1.msra.mxu0 0.0
  %150 = vmatprep.subr.mxu0 0.0
  %151 = vmatpush1.msra.mxu0 0.0
  %152 = vmatprep.mubr.f32.mxu0 0.0
  %153 = vmatmul.mubr.f32.gmra.mrb[0].mxu0 %v70
  %v154 = vpop.f32.mrb[0].mxu0
  %v155 = vadd.f32 0.0, %v154
  %v156 = vpop.f32.mrb[0].mxu0
  %157 = vmatprep.mubr.f32.mxu0 0.0
  %158 = vmatmul.mubr.f32.gmra.mrb[0].mxu0 %v73
  %v159 = vpop.f32.mrb[0].mxu0
  %v160 = vadd.f32 0.0, %v159
  %v161 = vpop.f32.mrb[0].mxu0
  %162 = vmatprep.mubr.f32.mxu0 0.0
  %163 = vmatmul.mubr.f32.gmra.mrb[0].mxu0 %v76
  %v164 = vpop.f32.mrb[0].mxu0
  %v165 = vadd.f32 0.0, %v164
  %v166 = vpop.f32.mrb[0].mxu0
  %167 = vmatprep.mubr.f32.mxu0 0.0
  %168 = vmatmul.mubr.f32.gmra.mrb[0].mxu0 %v79
  %v169 = vpop.f32.mrb[0].mxu0
  %v170 = vadd.f32 0.0, %v169
  %v171 = vpop.f32.mrb[0].mxu0
  %172 = vmatprep.mubr.f32.mxu0 0.0
  %173 = vmatmul.mubr.f32.gmra.mrb[0].mxu0 %v82
  %v174 = vpop.f32.mrb[0].mxu0
  %v175 = vadd.f32 0.0, %v174
  %v176 = vpop.f32.mrb[0].mxu0
  %177 = vdwg.mxu0
  %vm183 = vcmask 1046528
  %v184 = vrot.slane %v155, 1
  %v185 = vrot.slane %v160, 1
  %v186 = vsel %vm183, %v184, %v185
  %v187 = vrot.slane %v165, 1
  %v188 = vsel %vm183, %v185, %v187
  %v189 = vrot.slane %v170, 1
  %v190 = vsel %vm183, %v187, %v189
  %v191 = vrot.slane %v175, 1
  %v192 = vsel %vm183, %v189, %v191
  %193 = vrot.lane.b32.xlu0 %v186, 32
  %v194 = vpop.permute.xlu0 %193
  %195 = vrot.lane.b32.xlu0 %v188, 32
  %v196 = vpop.permute.xlu0 %195
  %197 = vrot.lane.b32.xlu0 %v190, 32
  %v198 = vpop.permute.xlu0 %197
  %199 = vrot.lane.b32.xlu0 %v192, 32
  %v200 = vpop.permute.xlu0 %199
  %vm205 = vcmask 1045504
  %v206 = vrot.slane %v155, 2
  %v207 = vrot.slane %v160, 2
  %v208 = vsel %vm205, %v206, %v207
  %v209 = vrot.slane %v165, 2
  %v210 = vsel %vm205, %v207, %v209
  %v211 = vrot.slane %v170, 2
  %v212 = vsel %vm205, %v209, %v211
  %v213 = vrot.slane %v175, 2
  %v214 = vsel %vm205, %v211, %v213
  %215 = vrot.lane.b32.xlu0 %v208, 64
  %v216 = vpop.permute.xlu0 %215
  %217 = vrot.lane.b32.xlu0 %v210, 64
  %v218 = vpop.permute.xlu0 %217
  %219 = vrot.lane.b32.xlu0 %v212, 64
  %v220 = vpop.permute.xlu0 %219
  %221 = vrot.lane.b32.xlu0 %v214, 64
  %v222 = vpop.permute.xlu0 %221
  %vm227 = vcmask 261120
  %v228 = vsel %vm227, %v155, %v194
  %v229 = vsel %vm227, %v160, %v196
  %v230 = vsel %vm227, %v165, %v198
  %v231 = vsel %vm227, %v170, %v200
  %vm232 = vcmask 523264
  %v233 = vsel %vm232, %v228, %v216
  %v234 = vsel %vm232, %v229, %v218
  %v235 = vsel %vm232, %v230, %v220
  %v236 = vsel %vm232, %v231, %v222
  %v237 = vld [vmem:[%s2] sm:$0xff]
  %v238 = vld [vmem:[%s2 + $0x8] sm:$0xff]
  %v239 = vld [vmem:[%s2 + $0x10] sm:$0xff]
  %v240 = vld [vmem:[%s2 + $0x18] sm:$0xff]
  %v241 = vld [vmem:[%s2 + $0x20] sm:$0xff]
  %v242 = vld [vmem:[%s2 + $0x28] sm:$0xff]
  %v243 = vld [vmem:[%s2 + $0x30] sm:$0xff]
  %v244 = vld [vmem:[%s2 + $0x38] sm:$0xff]
  %v245 = vld [vmem:[%s2 + $0x40] sm:$0xff]
  %v246 = vld [vmem:[%s2 + $0x48] sm:$0xff]
  %v247 = vld [vmem:[%s2 + $0x50] sm:$0xff]
  %v248 = vld [vmem:[%s2 + $0x58] sm:$0xff]
  %v249 = vld [vmem:[%s3] sm:$0x1]
  %v251 = vlaneseq
  %v252 = vshrl.u32 %v251, 7
  %v253 = vsub.s32 0, %v252
  %v254 = vrot.slane %v249, %v253
  %vm256 = vcmask 785408
  %v258 = vsel %vm256, %v233, 0
  %v261 = vsel %vm256, %v234, 0
  %v264 = vsel %vm256, %v235, 0
  %v267 = vsel %vm256, %v236, 0
  %269 = vmatprep.subr.mxu0 0.0
  %270 = vmatpush1.msra.mxu0 %v237
  %271 = vmatprep.subr.mxu0 0.0
  %272 = vmatpush1.msra.mxu0 %v238
  %273 = vmatprep.subr.mxu0 0.0
  %274 = vmatpush1.msra.mxu0 %v239
  %275 = vmatprep.subr.mxu0 0.0
  %276 = vmatpush1.msra.mxu0 %v240
  %277 = vmatprep.subr.mxu0 0.0
  %278 = vmatpush1.msra.mxu0 %v241
  %279 = vmatprep.subr.mxu0 0.0
  %280 = vmatpush1.msra.mxu0 %v242
  %281 = vmatprep.subr.mxu0 0.0
  %282 = vmatpush1.msra.mxu0 %v243
  %283 = vmatprep.subr.mxu0 0.0
  %284 = vmatpush1.msra.mxu0 %v244
  %285 = vmatprep.subr.mxu0 0.0
  %286 = vmatpush1.msra.mxu0 %v245
  %287 = vmatprep.subr.mxu0 0.0
  %288 = vmatpush1.msra.mxu0 %v246
  %289 = vmatprep.subr.mxu0 0.0
  %290 = vmatpush1.msra.mxu0 %v247
  %291 = vmatprep.subr.mxu0 0.0
  %292 = vmatpush1.msra.mxu0 %v248
  %293 = vmatprep.subr.mxu0 0.0
  %294 = vmatpush1.msra.mxu0 0.0
  %295 = vmatprep.subr.mxu0 0.0
  %296 = vmatpush1.msra.mxu0 0.0
  %297 = vmatprep.subr.mxu0 0.0
  %298 = vmatpush1.msra.mxu0 0.0
  %299 = vmatprep.subr.mxu0 0.0
  %300 = vmatpush1.msra.mxu0 0.0
  %301 = vmatprep.subr.mxu0 0.0
  %302 = vmatpush1.msra.mxu0 0.0
  %303 = vmatprep.subr.mxu0 0.0
  %304 = vmatpush1.msra.mxu0 0.0
  %305 = vmatprep.subr.mxu0 0.0
  %306 = vmatpush1.msra.mxu0 0.0
  %307 = vmatprep.subr.mxu0 0.0
  %308 = vmatpush1.msra.mxu0 0.0
  %309 = vmatprep.subr.mxu0 0.0
  %310 = vmatpush1.msra.mxu0 0.0
  %311 = vmatprep.subr.mxu0 0.0
  %312 = vmatpush1.msra.mxu0 0.0
  %313 = vmatprep.subr.mxu0 0.0
  %314 = vmatpush1.msra.mxu0 0.0
  %315 = vmatprep.subr.mxu0 0.0
  %316 = vmatpush1.msra.mxu0 0.0
  %317 = vmatprep.subr.mxu0 0.0
  %318 = vmatpush1.msra.mxu0 0.0
  %319 = vmatprep.subr.mxu0 0.0
  %320 = vmatpush1.msra.mxu0 0.0
  %321 = vmatprep.subr.mxu0 0.0
  %322 = vmatpush1.msra.mxu0 0.0
  %323 = vmatprep.subr.mxu0 0.0
  %324 = vmatpush1.msra.mxu0 0.0
  %325 = vmatprep.subr.mxu0 0.0
  %326 = vmatpush1.msra.mxu0 0.0
  %327 = vmatprep.subr.mxu0 0.0
  %328 = vmatpush1.msra.mxu0 0.0
  %329 = vmatprep.subr.mxu0 0.0
  %330 = vmatpush1.msra.mxu0 0.0
  %331 = vmatprep.subr.mxu0 0.0
  %332 = vmatpush1.msra.mxu0 0.0
  %333 = vmatprep.mubr.f32.mxu0 0.0
  %334 = vmatmul.mubr.f32.gmra.mrb[0].mxu0 %v258
  %v335 = vpop.f32.mrb[0].mxu0
  %v336 = vadd.f32 %v254, %v335
  %v337 = vpop.f32.mrb[0].mxu0
  %338 = vmatprep.mubr.f32.mxu0 0.0
  %339 = vmatmul.mubr.f32.gmra.mrb[0].mxu0 %v261
  %v340 = vpop.f32.mrb[0].mxu0
  %v341 = vadd.f32 %v254, %v340
  %v342 = vpop.f32.mrb[0].mxu0
  %343 = vmatprep.mubr.f32.mxu0 0.0
  %344 = vmatmul.mubr.f32.gmra.mrb[0].mxu0 %v264
  %v345 = vpop.f32.mrb[0].mxu0
  %v346 = vadd.f32 %v254, %v345
  %v347 = vpop.f32.mrb[0].mxu0
  %348 = vmatprep.mubr.f32.mxu0 0.0
  %349 = vmatmul.mubr.f32.gmra.mrb[0].mxu0 %v267
  %v350 = vpop.f32.mrb[0].mxu0
  %v351 = vadd.f32 %v254, %v350
  %v352 = vpop.f32.mrb[0].mxu0
  %353 = vdwg.mxu0
  %v354 = vmax.f32 %v336, 0.0
  %v355 = vmax.f32 %v341, 0.0
  %v356 = vmax.f32 %v346, 0.0
  %v357 = vmax.f32 %v351, 0.0
  %v358 = vlaneseq
  %v359 = vshrl.u32 %v358, 7
  %v360 = vadd.s32 %v359, 8
  %vm361 = vcmp.lt.s32.totalorder %v359, 14
  %vm362 = vcmp.lt.s32.totalorder %v360, 14
  %v363 = vsel %vm361, %v354, 0.0
  %v364 = vsel %vm362, %v355, 0.0
  %v365 = vsel %vm361, %v356, 0.0
  %v366 = vsel %vm362, %v357, 0.0
  %vm367 = vcmask 130048
  %v368 = vsel %vm367, %v363, -inf
  %v369 = vsel %vm367, %v364, -inf
  %v370 = vmax.f32 %v368, %v369
  %v371 = vrot.slane %v370, 4
  %v372 = vmax.f32 %v370, %v371
  %v373 = vrot.slane %v372, 2
  %v374 = vmax.f32 %v372, %v373
  %v375 = vrot.slane %v374, 1
  %v376 = vmax.f32 %v374, %v375
  %v377 = vsel %vm367, %v365, -inf
  %v378 = vsel %vm367, %v366, -inf
  %v379 = vmax.f32 %v377, %v378
  %v380 = vrot.slane %v379, 4
  %v381 = vmax.f32 %v379, %v380
  %v382 = vrot.slane %v381, 2
  %v383 = vmax.f32 %v381, %v382
  %v384 = vrot.slane %v383, 1
  %v385 = vmax.f32 %v383, %v384
  %v386 = vld [vmem:[%s4] sm:$0xff]
  %v387 = vld [vmem:[%s4 + $0x8] sm:$0xff]
  %s388 = sld [smem:[#allocation2]]
  %v389 = vstv %s388
  %vm392 = vcmask 1041409
  %v393 = vsel %vm392, %v385, %v376
  %v394 = vsel %vm367, %v393, 0
  %396 = vmatprep.subr.mxu0 0.0
  %397 = vmatpush1.msra.mxu0 %v386
  %398 = vmatprep.subr.mxu0 0.0
  %399 = vmatpush1.msra.mxu0 %v387
  %400 = vmatprep.subr.mxu0 0.0
  %401 = vmatpush1.msra.mxu0 0.0
  %402 = vmatprep.subr.mxu0 0.0
  %403 = vmatpush1.msra.mxu0 0.0
  %404 = vmatprep.subr.mxu0 0.0
  %405 = vmatpush1.msra.mxu0 0.0
  %406 = vmatprep.subr.mxu0 0.0
  %407 = vmatpush1.msra.mxu0 0.0
  %408 = vmatprep.subr.mxu0 0.0
  %409 = vmatpush1.msra.mxu0 0.0
  %410 = vmatprep.subr.mxu0 0.0
  %411 = vmatpush1.msra.mxu0 0.0
  %412 = vmatprep.subr.mxu0 0.0
  %413 = vmatpush1.msra.mxu0 0.0
  %414 = vmatprep.subr.mxu0 0.0
  %415 = vmatpush1.msra.mxu0 0.0
  %416 = vmatprep.subr.mxu0 0.0
  %417 = vmatpush1.msra.mxu0 0.0
  %418 = vmatprep.subr.mxu0 0.0
  %419 = vmatpush1.msra.mxu0 0.0
  %420 = vmatprep.subr.mxu0 0.0
  %421 = vmatpush1.msra.mxu0 0.0
  %422 = vmatprep.subr.mxu0 0.0
  %423 = vmatpush1.msra.mxu0 0.0
  %424 = vmatprep.subr.mxu0 0.0
  %425 = vmatpush1.msra.mxu0 0.0
  %426 = vmatprep.subr.mxu0 0.0
  %427 = vmatpush1.msra.mxu0 0.0
  %428 = vmatprep.subr.mxu0 0.0
  %429 = vmatpush1.msra.mxu0 0.0
  %430 = vmatprep.subr.mxu0 0.0
  %431 = vmatpush1.msra.mxu0 0.0
  %432 = vmatprep.subr.mxu0 0.0
  %433 = vmatpush1.msra.mxu0 0.0
  %434 = vmatprep.subr.mxu0 0.0
  %435 = vmatpush1.msra.mxu0 0.0
  %436 = vmatprep.subr.mxu0 0.0
  %437 = vmatpush1.msra.mxu0 0.0
  %438 = vmatprep.subr.mxu0 0.0
  %439 = vmatpush1.msra.mxu0 0.0
  %440 = vmatprep.subr.mxu0 0.0
  %441 = vmatpush1.msra.mxu0 0.0
  %442 = vmatprep.subr.mxu0 0.0
  %443 = vmatpush1.msra.mxu0 0.0
  %444 = vmatprep.subr.mxu0 0.0
  %445 = vmatpush1.msra.mxu0 0.0
  %446 = vmatprep.subr.mxu0 0.0
  %447 = vmatpush1.msra.mxu0 0.0
  %448 = vmatprep.subr.mxu0 0.0
  %449 = vmatpush1.msra.mxu0 0.0
  %450 = vmatprep.subr.mxu0 0.0
  %451 = vmatpush1.msra.mxu0 0.0
  %452 = vmatprep.subr.mxu0 0.0
  %453 = vmatpush1.msra.mxu0 0.0
  %454 = vmatprep.subr.mxu0 0.0
  %455 = vmatpush1.msra.mxu0 0.0
  %456 = vmatprep.subr.mxu0 0.0
  %457 = vmatpush1.msra.mxu0 0.0
  %458 = vmatprep.subr.mxu0 0.0
  %459 = vmatpush1.msra.mxu0 0.0
  %460 = vmatprep.mubr.f32.mxu0 0.0
  %461 = vmatmul.mubr.f32.gmra.mrb[0].mxu0 %v394
  %v462 = vpop.f32.mrb[0].mxu0
  %v463 = vadd.f32 %v389, %v462
  %v464 = vpop.f32.mrb[0].mxu0
  %465 = vdwg.mxu0
  %v466 = vxor.u32 %v463, 2147483648
  %v467 = vmul.f32 %v466, 1.442695
  %v468 = vpow.pop %v467
  %v469 = vadd.f32 %v468, 1.0
  %v470 = vrcp.pop %v469
  %v471 = vmul.f32 1.0, %v470
  %vm472 = vcmask 1024
  %473 = vst.msk [vmem:[%s6] sm:$0x3] %vm472, %v471
  // Predicated region
  $region26: #{cnn_forward.1} parent=0 // pred_check
    _
  $region27: #{cnn_forward.1} parent=0 // pred_check_branch
    %475 = sbr.rel (0) target = $region29
  $region28: #{cnn_forward.1} parent=0 // pred_region
    _
  $region29: #{cnn_forward.1} parent=0 // pred_fallthru
    _
  // Predicated region
  $region30: #{cnn_forward.1} parent=0 // pred_check
    _
  $region31: #{cnn_forward.1} parent=0 // pred_check_branch
    %477 = sbr.rel (0) target = $region33
  $region32: #{cnn_forward.1} parent=0 // pred_region
    _
  $region33: #{cnn_forward.1} parent=0 // pred_fallthru
    _

</llo_original>
